<compile_context>
chip_gen: v5e
topology: v5e:2x2
jax: 0.10.0
libtpu: 0.0.40
codegen_flags: <defaults>
</compile_context>

<pallas_src>
import functools
import numpy as np

import jax
import jax.numpy as jnp
from jax.experimental import pallas as pl
from jax.experimental.pallas import tpu as pltpu


# ----------------------------------------------------------------------------
# Parameter / buffer construction (deterministic, matches nn.Module __init__)
# ----------------------------------------------------------------------------
def make_positional_encoding(model_dimensions: int, max_len: int = 5000) -> jnp.ndarray:
    """Builds pe of shape (1, max_len, model_dimensions), float32."""
    assert model_dimensions % 2 == 0, "model_dimensions must be even (as in the PyTorch module)"
    position = np.arange(max_len, dtype=np.float32)[:, None]                     # (max_len, 1)
    div_term = np.exp(
        np.arange(0, model_dimensions, 2, dtype=np.float32)
        * (-np.log(10000.0) / model_dimensions)
    )                                                                             # (D/2,)
    pe = np.zeros((1, max_len, model_dimensions), dtype=np.float32)
    pe[0, :, 0::2] = np.sin(position * div_term)
    pe[0, :, 1::2] = np.cos(position * div_term)
    return jnp.asarray(pe)


# ----------------------------------------------------------------------------
# Tiling policy
# ----------------------------------------------------------------------------
def _choose_tiles(B: int, N: int, itemsize: int):
    """Pick (TB, TN) for a (B, N) view: lane-dense TN, ~2 MiB blocks."""
    if N % 128 == 0:
        TN = min(N, 16384)          # multiple of 128 -> unmasked vector stores
    else:
        TN = N                      # full last dim (allowed by the (8,128) rule)
    target_bytes = 2 * 1024 * 1024  # per-block budget; keeps double buffers small
    tb = max(1, target_bytes // (TN * itemsize))
    if tb >= B:
        TB = B
    else:
        TB = max(8, (tb // 8) * 8)  # second-to-last dim multiple of 8
        if TB > B:
            TB = B
    return TB, TN


# ----------------------------------------------------------------------------
# Kernels
# ----------------------------------------------------------------------------
def _pe_add_kernel(x_ref, pe_ref, o_ref):
    # x_ref: (TB, TN), pe_ref: (1, TN) -> broadcasted add, single store in x dtype
    o_ref[...] = x_ref[...] + pe_ref[...]


def _pe_add_dropout_kernel(x_ref, pe_ref, bits_ref, o_ref, *, threshold, scale):
    # Inverted dropout: keep with prob 1-p, scale kept values by 1/(1-p).
    # Random uint32 bits are precomputed on the host side; keep decision is a
    # single unsigned integer compare against a compile-time threshold.
    y = x_ref[...] + pe_ref[...]
    keep = bits_ref[...] >= jnp.uint32(threshold)
    o_ref[...] = jnp.where(keep, y * scale, jnp.zeros_like(y)).astype(o_ref.dtype)


# ----------------------------------------------------------------------------
# Wrapper
# ----------------------------------------------------------------------------
def positional_encoding_forward(
    x: jnp.ndarray,
    pe: jnp.ndarray,
    *,
    dropout_p: float = 0.0,
    training: bool = False,
    rng_key=None,
) -> jnp.ndarray:
    """x: (B, S, D). Returns dropout(x + pe[:, :S, :]) with PyTorch semantics."""
    B, S, D = x.shape
    N = S * D

    # Flatten to lane-dense 2-D views; cast pe once to x.dtype (single dtype path).
    x2 = x.reshape(B, N)
    pe2 = pe[0, :S, :].astype(x.dtype).reshape(1, N)

    TB, TN = _choose_tiles(B, N, jnp.dtype(x.dtype).itemsize)
    grid = (pl.cdiv(N, TN), pl.cdiv(B, TB))   # N-tile axis outer, batch inner

    x_spec = pl.BlockSpec((TB, TN), lambda j, i: (i, j))
    pe_spec = pl.BlockSpec((1, TN), lambda j, i: (0, j))   # invariant over inner axis
    out_spec = pl.BlockSpec((TB, TN), lambda j, i: (i, j))
    out_shape = jax.ShapeDtypeStruct((B, N), x.dtype)

    cparams = pltpu.CompilerParams(
        dimension_semantics=("parallel", "parallel"),
        vmem_limit_bytes=48 * 1024 * 1024,
    )

    if training and dropout_p > 0.0:
        if rng_key is None:
            rng_key = jax.random.PRNGKey(0)
        bits = jax.random.bits(rng_key, (B, N), dtype=jnp.uint32)
        threshold = min(int(round(float(dropout_p) * 2.0 ** 32)), 2 ** 32 - 1)
        scale = 1.0 / (1.0 - float(dropout_p))
        kernel = functools.partial(_pe_add_dropout_kernel, threshold=threshold, scale=scale)
        out2 = pl.pallas_call(
            kernel,
            out_shape=out_shape,
            grid_spec=pl.GridSpec(
                grid=grid,
                in_specs=[x_spec, pe_spec,
                          pl.BlockSpec((TB, TN), lambda j, i: (i, j))],
                out_specs=out_spec,
            ),
            compiler_params=cparams,
        )(x2, pe2, bits)
    else:
        # Eval mode: dropout is the identity.
        out2 = pl.pallas_call(
            _pe_add_kernel,
            out_shape=out_shape,
            grid_spec=pl.GridSpec(
                grid=grid,
                in_specs=[x_spec, pe_spec],
                out_specs=out_spec,
            ),
            compiler_params=cparams,
        )(x2, pe2)

    return out2.reshape(B, S, D)


# ----------------------------------------------------------------------------
# Main
# ----------------------------------------------------------------------------
if __name__ == "__main__":
    B, S, D = 2, 8, 32
    dropout_p = 0.1
    max_len = 64  # > S, consistent with module semantics

    key = jax.random.PRNGKey(0)
    x = jax.random.normal(key, (B, S, D), dtype=jnp.float32)

    pe = make_positional_encoding(D, max_len=max_len)

    # --- Eval-mode forward (dropout == identity), deterministic check. -------
    out = positional_encoding_forward(x, pe, dropout_p=dropout_p, training=False)
    out = jax.block_until_ready(out)
    ref = x + pe[:, :S, :]
    np.testing.assert_allclose(np.asarray(out), np.asarray(ref), rtol=1e-6, atol=1e-6)

    # --- Training-mode forward (dropout), check against the same mask bits. --
    drop_key = jax.random.PRNGKey(123)
    out_train = positional_encoding_forward(
        x, pe, dropout_p=dropout_p, training=True, rng_key=drop_key
    )
    out_train = jax.block_until_ready(out_train)
    assert out_train.shape == (B, S, D)

    bits_ref = np.asarray(
        jax.random.bits(drop_key, (B, S * D), dtype=jnp.uint32)
    ).reshape(B, S, D)
    thr = min(int(round(dropout_p * 2.0 ** 32)), 2 ** 32 - 1)
    keep_ref = bits_ref >= np.uint32(thr)
    scale = np.float32(1.0 / (1.0 - dropout_p))
    train_ref = np.where(keep_ref, np.asarray(ref, dtype=np.float32) * scale, 0.0)
    np.testing.assert_allclose(np.asarray(out_train), train_ref, rtol=1e-5, atol=1e-6)

    print("KERNEL_OK")
</pallas_src>

<mosaic_0001>
module attributes {stable_mosaic.version = 11 : i64} {
  func.func @_pe_add_kernel(%arg0: i32, %arg1: i32, %arg2: memref<2x256xf32, #tpu.memory_space<vmem>>, %arg3: memref<1x256xf32, #tpu.memory_space<vmem>>, %arg4: memref<2x256xf32, #tpu.memory_space<vmem>>) attributes {dimension_semantics = [#tpu.dimension_semantics<parallel>, #tpu.dimension_semantics<parallel>], iteration_bounds = array<i64: 1, 1>, scalar_prefetch = 0 : i64, scratch_operands = 0 : i64, tpu.core_type = #tpu.core_type<tc>, window_params = [{transform_indices = @transform_0, window_bounds = array<i64: 2, 256>}, {transform_indices = @transform_1, window_bounds = array<i64: 1, 256>}, {transform_indices = @transform_2, window_bounds = array<i64: 2, 256>}]} {
    %c0 = arith.constant 0 : index
    %c0_0 = arith.constant 0 : index
    %0 = vector.load %arg2[%c0, %c0_0] : memref<2x256xf32, #tpu.memory_space<vmem>>, vector<2x256xf32>
    %c0_1 = arith.constant 0 : index
    %c0_2 = arith.constant 0 : index
    %1 = vector.load %arg3[%c0_1, %c0_2] : memref<1x256xf32, #tpu.memory_space<vmem>>, vector<1x256xf32>
    %2 = vector.broadcast %1 : vector<1x256xf32> to vector<2x256xf32>
    %3 = arith.addf %0, %2 : vector<2x256xf32>
    %c0_3 = arith.constant 0 : index
    %c0_4 = arith.constant 0 : index
    %4 = vector.load %arg4[%c0_3, %c0_4] : memref<2x256xf32, #tpu.memory_space<vmem>>, vector<2x256xf32>
    tpu.vector_store %arg4[%c0_3, %c0_4], %3 {strides = array<i32>} : memref<2x256xf32, #tpu.memory_space<vmem>>, vector<2x256xf32>,
    return
  }
  func.func @transform_0(%arg0: i32, %arg1: i32) -> (i32, i32) {
    %c0_i32 = arith.constant 0 : i32
    return %arg1, %arg0 : i32, i32
  }
  func.func @transform_1(%arg0: i32, %arg1: i32) -> (i32, i32) {
    %c0_i32 = arith.constant 0 : i32
    %c0_i32_0 = arith.constant 0 : i32
    return %c0_i32, %arg0 : i32, i32
  }
  func.func @transform_2(%arg0: i32, %arg1: i32) -> (i32, i32) {
    %c0_i32 = arith.constant 0 : i32
    return %arg1, %arg0 : i32, i32
  }
}

</mosaic_0001>

<llo_original>
// kernel: tpu_custom_call.1
$region0: #{tpu_custom_call.1}
  #allocation0 [shape = 'u32[]', space=smem, size = 0x4, offset = 0x4, fixed_abs, tag = 'smem constant byte address 0x4 - core index']
  #allocation1 [shape = 'u32[72,128]{1,0:T(1,128)}', space=vmem, size = 0x9000, scoped, tag = 'internal scratch']
  %s0 = inlined_call_operand.hbm [shape: f32[2,256], index: 0, kind: input, shape index: {}]
  %s1 = inlined_call_operand.hbm [shape: f32[1,256], index: 1, kind: input, shape index: {}]
  %s2 = inlined_call_operand.hbm [shape: f32[2,256], index: 2, kind: output, shape index: {}]
  %s3 = sld [smem:[#allocation0]]
  $region26: #{tpu_custom_call.1} parent=0
    _
  %s5 = ssub.s32 1, %s3
  %s6 = scalar_select 0, %s5, %s3
  $region1: #{tpu_custom_call.1} parent=0
    #allocation2 [shape = 'u8[2048]{0}', space=vmem, size = 0x800, scoped, tag = 'input window, operand 0, single buffered']
    #allocation3 [shape = 's32[1]{0}', space=sflag, size = 0x4, scoped, tag = 'scoped memory for tpu_custom_call.1']
    #allocation4 [shape = 's32[1]{0}', space=sflag, size = 0x4, scoped, tag = 'scoped memory for tpu_custom_call.1']
    #allocation5 [shape = 'u8[1024]{0}', space=vmem, size = 0x400, scoped, tag = 'input window, operand 1, single buffered']
    #allocation6 [shape = 's32[1]{0}', space=sflag, size = 0x4, scoped, tag = 'scoped memory for tpu_custom_call.1']
    #allocation7 [shape = 'u8[2048]{0}', space=vmem, size = 0x800, scoped, tag = 'output window, operand 0, single buffered']
    %7 = vsyncpa [#allocation3], 0
    %8 = vsyncpa [#allocation6], 0
    %9 = vsyncpa [#allocation4], 0
    // Predicated region
    $region2: #{tpu_custom_call.1} parent=1 // pred_check
      _
    $region3: #{tpu_custom_call.1} parent=1 // pred_check_branch
      %11 = sbr.rel (0) target = $region5
    $region4: #{tpu_custom_call.1} parent=1 // pred_region
      %13 = vsyncadd [#allocation3], 0
      %s15 = sshll.u32 %s0, 4
      %s16 = int_to_ptr.hbm [resolvable:$true] %s15
      %s17 = sshll.u32 [#allocation2], 4
      %s18 = int_to_ptr.vmem [resolvable:$true] %s17
      %20 = dma.hbm_to_vmem [thread:$0]  %s16, 64, %s18, [#allocation3]
    $region5: #{tpu_custom_call.1} parent=1 // pred_fallthru
      _
    // Predicated region
    $region6: #{tpu_custom_call.1} parent=1 // pred_check
      _
    $region7: #{tpu_custom_call.1} parent=1 // pred_check_branch
      %22 = sbr.rel (0) target = $region9
    $region8: #{tpu_custom_call.1} parent=1 // pred_region
      %24 = vsyncadd [#allocation6], 0
      %s26 = sshll.u32 %s1, 4
      %s27 = int_to_ptr.hbm [resolvable:$true] %s26
      %s28 = sshll.u32 [#allocation5], 4
      %s29 = int_to_ptr.vmem [resolvable:$true] %s28
      %31 = dma.hbm_to_vmem [thread:$0]  %s27, 32, %s29, [#allocation6]
    $region9: #{tpu_custom_call.1} parent=1 // pred_fallthru
      _
    // Predicated region
    $region10: #{tpu_custom_call.1} parent=1 // pred_check
      _
    $region11: #{tpu_custom_call.1} parent=1 // pred_check_branch
      %33 = sbr.rel (0) target = $region13
    $region12: #{tpu_custom_call.1} parent=1 // pred_region
      %35 = dma.done [#allocation3], 64
    $region13: #{tpu_custom_call.1} parent=1 // pred_fallthru
      _
    // Predicated region
    $region14: #{tpu_custom_call.1} parent=1 // pred_check
      _
    $region15: #{tpu_custom_call.1} parent=1 // pred_check_branch
      %37 = sbr.rel (0) target = $region17
    $region16: #{tpu_custom_call.1} parent=1 // pred_region
      %39 = dma.done [#allocation6], 32
    $region17: #{tpu_custom_call.1} parent=1 // pred_fallthru
      _
    %v40 = vld [vmem:[#allocation2] sm:$0xf]
    %v41 = vld [vmem:[#allocation5] sm:$0x3]
    %v43 = vperm.slane %v41, 0
    %v44 = vperm.slane %v41, 1
    %v45 = vrot.slane %v44, 6
    %vm46 = vcmask 1041408
    %v47 = vsel %vm46, %v43, %v45
    %v49 = vadd.f32 %v40, %v47
    %50 = vst [vmem:[#allocation7] sm:$0xf] %v49
    // Predicated region
    $region18: #{tpu_custom_call.1} parent=1 // pred_check
      _
    $region19: #{tpu_custom_call.1} parent=1 // pred_check_branch
      %52 = sbr.rel (0) target = $region21
    $region20: #{tpu_custom_call.1} parent=1 // pred_region
      %54 = vsyncadd [#allocation4], 0
      %s56 = sshll.u32 [#allocation7], 4
      %s57 = int_to_ptr.vmem [resolvable:$true] %s56
      %s58 = sshll.u32 %s2, 4
      %s59 = int_to_ptr.hbm [resolvable:$true] %s58
      %61 = dma.vmem_to_hbm [thread:$0]  %s57, 64, %s59, [#allocation4]
    $region21: #{tpu_custom_call.1} parent=1 // pred_fallthru
      _
    // Predicated region
    $region22: #{tpu_custom_call.1} parent=1 // pred_check
      _
    $region23: #{tpu_custom_call.1} parent=1 // pred_check_branch
      %63 = sbr.rel (0) target = $region25
    $region24: #{tpu_custom_call.1} parent=1 // pred_region
      %65 = dma.done [#allocation4], 64
    $region25: #{tpu_custom_call.1} parent=1 // pred_fallthru
      _
    %66 = vsyncpa [#allocation3], 1
    %67 = vsyncpa [#allocation6], 1
    %68 = vsyncpa [#allocation4], 1

</llo_original>
